<compile_context>
chip_gen: v5e
topology: v5e:2x2
jax: 0.10.0
libtpu: 0.0.40
codegen_flags: <defaults>
</compile_context>

<pallas_src>
import math

import jax
import jax.numpy as jnp
from jax import lax
from jax.experimental import pallas as pl
from jax.experimental.pallas import tpu as pltpu

LANE = 128
SUBLANE = 8
ACC_ROWS = 64                          # accumulator slab height (cuts add-chain 8x vs 8)
TARGET_BLOCK_BYTES = 2 * 1024 * 1024   # ~2 MiB per input block per grid step
MIN_PALLAS_ELEMS = 262144              # below this a fused XLA reduce beats a kernel launch
VMEM_LIMIT_BYTES = 40 * 1024 * 1024    # explicit limit: > needed (~9 MiB), < v7x physical 64 MiB


def _round_up(x, m):
    return (x + m - 1) // m * m


def _row_align(dtype):
    # Minimum sublane multiple so a block is a whole packed tile for this dtype
    # (f32 -> 8, bf16 -> 16, int8/fp8 -> 32).  All of these divide ACC_ROWS=64.
    return max(SUBLANE, 32 // jnp.dtype(dtype).itemsize)


def _num_tensorcores():
    """Best-effort TensorCores-per-chip count (2 on v7x-style chips, else 1)."""
    try:
        info = pltpu.get_tpu_info()
        for attr in ("num_cores", "core_count", "num_tensorcores", "tensorcore_count"):
            n = getattr(info, attr, None)
            if isinstance(n, int) and n >= 1:
                return max(1, min(int(n), 2))
    except Exception:
        pass
    try:
        kind = jax.devices()[0].device_kind.lower()
        if "v7" in kind:
            return 2
    except Exception:
        pass
    return 1


def _make_sse_kernel(block_rows, acc_rows, rows_valid, needs_mask, first_masked_block):
    chunks = block_rows // acc_rows

    def kernel(pred_ref, next_ref, acc_ref):
        p = pl.program_id(0)          # partial (core) index      - "parallel"
        i = pl.program_id(1)          # row-block within partial  - "arbitrary"

        @pl.when(i == 0)
        def _():
            acc_ref[...] = jnp.zeros_like(acc_ref)

        # Widen to f32 on the VPU (inputs streamed in native dtype).
        diff = pred_ref[...].astype(jnp.float32) - next_ref[...].astype(jnp.float32)

        def accumulate(d):
            sq = d * d
            # Keep the accumulator a lane-dense (acc_rows,128) slab: the
            # reshape splits whole (8,128) tiles (free) and the reduction over
            # the leading axis is a short chain of wide VPU adds; the single
            # expensive scalar collapse happens once, in the JAX glue.
            acc_ref[...] += jnp.sum(sq.reshape(chunks, acc_rows, LANE), axis=0)

        if needs_mask:
            # Mask code is compiled only when needed, and executed only for the
            # ragged-tail / duplicated overflow blocks; interior steps stay
            # mask-free (pure stream + square + add).
            glob = p * pl.num_programs(1) + i

            @pl.when(glob < first_masked_block)
            def _():
                accumulate(diff)

            @pl.when(glob >= first_masked_block)
            def _():
                base = glob * block_rows
                row_ids = base + lax.broadcasted_iota(jnp.int32, (block_rows, LANE), 0)
                # Mask diff BEFORE squaring so out-of-bounds garbage (NaN/Inf)
                # is discarded by the select.
                accumulate(jnp.where(row_ids < rows_valid, diff, 0.0))
        else:
            accumulate(diff)

    return kernel


def _sum_squared_error(pred2d, next2d, *, max_block_rows=None, num_parts=None):
    """Sum of squared differences of two (rows, 128) arrays via Pallas."""
    rows, lane = pred2d.shape
    assert lane == LANE
    assert rows < (1 << 31), "int32 row-id mask would overflow"

    itemsize = max(jnp.dtype(pred2d.dtype).itemsize, jnp.dtype(next2d.dtype).itemsize)
    align = max(_row_align(pred2d.dtype), _row_align(next2d.dtype))  # 8/16/32

    if max_block_rows is not None:
        # Explicit override (used in tests to force multi-block grids).
        block_rows = min(_round_up(rows, align), _round_up(max_block_rows, align))
    else:
        # Dtype-aware sizing: ~TARGET_BLOCK_BYTES per input per step.
        target_rows = max(align, TARGET_BLOCK_BYTES // (LANE * itemsize))
        if rows <= target_rows:
            block_rows = _round_up(rows, align)        # single block
        else:
            block_rows = max(ACC_ROWS, (target_rows // ACC_ROWS) * ACC_ROWS)

    acc_rows = math.gcd(block_rows, ACC_ROWS)          # >= 8, divides block_rows

    total_blocks = -(-rows // block_rows)
    if num_parts is None:
        cores = _num_tensorcores()
        num_parts = cores if (cores > 1 and total_blocks >= cores) else 1
    num_parts = max(1, int(num_parts))

    inner = -(-total_blocks // num_parts)
    last_block = total_blocks - 1
    covered_blocks = num_parts * inner
    needs_mask = covered_blocks * block_rows != rows
    first_masked_block = rows // block_rows if rows % block_rows else total_blocks

    if covered_blocks > total_blocks:
        # Keep block indices in-bounds; duplicated blocks are fully masked.
        def in_map(p, i):
            return (jnp.minimum(p * inner + i, last_block), 0)
    else:
        def in_map(p, i):
            return (p * inner + i, 0)

    partials = pl.pallas_call(
        _make_sse_kernel(block_rows, acc_rows, rows, needs_mask, first_masked_block),
        out_shape=jax.ShapeDtypeStruct((num_parts * acc_rows, LANE), jnp.float32),
        grid_spec=pltpu.PrefetchScalarGridSpec(
            num_scalar_prefetch=0,
            grid=(num_parts, inner),
            in_specs=[
                pl.BlockSpec((block_rows, LANE), in_map),
                pl.BlockSpec((block_rows, LANE), in_map),
            ],
            # Lane-dense partial-sum slab per partial; resident across the
            # inner axis so it doubles as the accumulator.
            out_specs=pl.BlockSpec((acc_rows, LANE), lambda p, i: (p, 0)),
        ),
        compiler_params=pltpu.CompilerParams(
            dimension_semantics=("parallel", "arbitrary"),
            vmem_limit_bytes=VMEM_LIMIT_BYTES),
    )(pred2d, next2d)

    return jnp.sum(partials)


def pred_mse_reg(obs_pred, obs_next, z=None, beta_energy=0.0,
                 use_pallas=None, max_block_rows=None, num_parts=None):
    """Matches predMSE_reg.forward: returns (totalloss, predloss)."""
    assert obs_pred.shape == obs_next.shape
    n_elems = obs_pred.size

    if use_pallas is None:
        use_pallas = (n_elems % LANE == 0) and (n_elems >= MIN_PALLAS_ELEMS)

    if use_pallas and n_elems % LANE == 0:
        rows = n_elems // LANE
        # Layout-preserving reshape - inputs stay in native dtype.
        pred2d = obs_pred.reshape(rows, LANE)
        next2d = obs_next.reshape(rows, LANE)
        sse = _sum_squared_error(pred2d, next2d,
                                 max_block_rows=max_block_rows,
                                 num_parts=num_parts)
        predloss = sse / jnp.float32(n_elems)
    else:
        # TODO(synk): lane-ragged sizes (n_elems % 128 != 0) and tiny tensors
        # use a single fused XLA reduce instead of the Pallas kernel.
        diff = obs_pred.astype(jnp.float32) - obs_next.astype(jnp.float32)
        predloss = jnp.mean(diff * diff)

    if z is not None:
        # energyloss = beta_energy * torch.linalg.vector_norm(z).sum()
        # (scalar-sized work; computed in plain JAX glue, not a kernel).
        energyloss = beta_energy * jnp.sqrt(
            jnp.sum(jnp.square(z.astype(jnp.float32))))
    else:
        energyloss = jnp.float32(0.0)

    totalloss = predloss + energyloss
    return totalloss, predloss


if __name__ == "__main__":
    key = jax.random.PRNGKey(0)
    k1, k2, k3, k4, k5, k6, k7 = jax.random.split(key, 7)

    # Small shapes consistent with the module: NCHW observations + latent z.
    obs_pred = jax.random.normal(k1, (2, 4, 16, 16), dtype=jnp.float32)
    obs_next = jax.random.normal(k2, (2, 4, 16, 16), dtype=jnp.float32)
    z = jax.random.normal(k3, (2, 32), dtype=jnp.float32)

    def ref_loss(a, b, zz, beta):
        p = jnp.mean((a.astype(jnp.float32) - b.astype(jnp.float32)) ** 2)
        e = beta * jnp.sqrt(jnp.sum(jnp.square(zz.astype(jnp.float32))))
        return p + e, p

    rt, rp = ref_loss(obs_pred, obs_next, z, 0.0)

    # 1) Force the Pallas path on the small test shape (single full-array block).
    total, pred = pred_mse_reg(obs_pred, obs_next, z, beta_energy=0.0,
                               use_pallas=True)
    jax.block_until_ready((total, pred))
    assert jnp.allclose(pred, rp, rtol=1e-5, atol=1e-6)
    assert jnp.allclose(total, rt, rtol=1e-5, atol=1e-6)

    # 2) Multi-block grid + forced 2-way partial split + in-kernel ragged-tail
    #    masking (gated to the last block) + nonzero beta_energy regularizer.
    op2 = jax.random.normal(k4, (2, 3, 16, 16), dtype=jnp.float32)  # 12 rows of 128
    on2 = jax.random.normal(k5, (2, 3, 16, 16), dtype=jnp.float32)
    total2, pred2 = pred_mse_reg(op2, on2, z, beta_energy=0.5,
                                 use_pallas=True, max_block_rows=8, num_parts=2)
    jax.block_until_ready((total2, pred2))
    rt2, rp2 = ref_loss(op2, on2, z, 0.5)
    assert jnp.allclose(pred2, rp2, rtol=1e-5, atol=1e-6)
    assert jnp.allclose(total2, rt2, rtol=1e-5, atol=1e-6)

    # 3) Native-dtype streaming (bf16 in, f32 accumulation inside the kernel).
    opb = obs_pred.astype(jnp.bfloat16)
    onb = obs_next.astype(jnp.bfloat16)
    total3, pred3 = pred_mse_reg(opb, onb, z, beta_energy=0.0, use_pallas=True)
    jax.block_until_ready((total3, pred3))
    _, rp3 = ref_loss(opb, onb, z, 0.0)
    assert jnp.allclose(pred3, rp3, rtol=1e-4, atol=1e-5)

    # 4) Larger tensor: auto-dispatch takes the Pallas path (>= MIN_PALLAS_ELEMS),
    #    exercising the widened (64,128) accumulator reduce (chunks > 1).
    op4 = jax.random.normal(k6, (8, 4, 96, 128), dtype=jnp.float32)  # 3072 rows of 128
    on4 = jax.random.normal(k7, (8, 4, 96, 128), dtype=jnp.float32)
    total4, pred4 = pred_mse_reg(op4, on4, z, beta_energy=0.25)
    jax.block_until_ready((total4, pred4))
    rt4, rp4 = ref_loss(op4, on4, z, 0.25)
    assert jnp.allclose(pred4, rp4, rtol=1e-4, atol=1e-6)
    assert jnp.allclose(total4, rt4, rtol=1e-4, atol=1e-6)

    # 5) Auto-dispatch: tiny tensor routes to the fused XLA path.
    total5, pred5 = pred_mse_reg(obs_pred, obs_next, z)
    jax.block_until_ready((total5, pred5))
    assert jnp.allclose(pred5, rp, rtol=1e-5, atol=1e-6)
    assert jnp.allclose(total5, rt, rtol=1e-5, atol=1e-6)

    print("KERNEL_OK")
</pallas_src>

<mosaic_0001>
module attributes {stable_mosaic.version = 11 : i64} {
  func.func @kernel(%arg0: i32, %arg1: i32, %arg2: memref<16x128xf32, #tpu.memory_space<vmem>>, %arg3: memref<16x128xf32, #tpu.memory_space<vmem>>, %arg4: memref<16x128xf32, #tpu.memory_space<vmem>>) attributes {dimension_semantics = [#tpu.dimension_semantics<parallel>, #tpu.dimension_semantics<arbitrary>], iteration_bounds = array<i64: 1, 1>, scalar_prefetch = 0 : i64, scratch_operands = 0 : i64, tpu.core_type = #tpu.core_type<tc>, window_params = [{transform_indices = @transform_0, window_bounds = array<i64: 16, 128>}, {transform_indices = @transform_1, window_bounds = array<i64: 16, 128>}, {transform_indices = @transform_2, window_bounds = array<i64: 16, 128>}]} {
    %c0_i32 = arith.constant 0 : i32
    %0 = arith.cmpi eq, %arg1, %c0_i32 : i32
    %1 = arith.extui %0 : i1 to i32
    %c0_i32_0 = arith.constant 0 : i32
    %2 = arith.cmpi ne, %1, %c0_i32_0 : i32
    scf.if %2 {
      %cst_8 = arith.constant 0.000000e+00 : f32
      %12 = vector.broadcast %cst_8 : f32 to vector<16x128xf32>
      %c0_9 = arith.constant 0 : index
      %c0_10 = arith.constant 0 : index
      %13 = vector.load %arg4[%c0_9, %c0_10] : memref<16x128xf32, #tpu.memory_space<vmem>>, vector<16x128xf32>
      tpu.vector_store %arg4[%c0_9, %c0_10], %12 {strides = array<i32>} : memref<16x128xf32, #tpu.memory_space<vmem>>, vector<16x128xf32>,
    } else {
    }
    %c0 = arith.constant 0 : index
    %c0_1 = arith.constant 0 : index
    %3 = vector.load %arg2[%c0, %c0_1] : memref<16x128xf32, #tpu.memory_space<vmem>>, vector<16x128xf32>
    %c0_2 = arith.constant 0 : index
    %c0_3 = arith.constant 0 : index
    %4 = vector.load %arg3[%c0_2, %c0_3] : memref<16x128xf32, #tpu.memory_space<vmem>>, vector<16x128xf32>
    %5 = arith.subf %3, %4 : vector<16x128xf32>
    %6 = arith.mulf %5, %5 : vector<16x128xf32>
    %c0_4 = arith.constant 0 : index
    %c0_5 = arith.constant 0 : index
    %7 = vector.load %arg4[%c0_4, %c0_5] : memref<16x128xf32, #tpu.memory_space<vmem>>, vector<16x128xf32>
    %8 = vector.shape_cast %6 : vector<16x128xf32> to vector<1x16x128xf32>
    %cst = arith.constant dense<0.000000e+00> : vector<16x128xf32>
    %9 = vector.multi_reduction <add>, %8, %cst [0] : vector<1x16x128xf32> to vector<16x128xf32>
    %10 = arith.addf %7, %9 : vector<16x128xf32>
    %c0_6 = arith.constant 0 : index
    %c0_7 = arith.constant 0 : index
    %11 = vector.load %arg4[%c0_6, %c0_7] : memref<16x128xf32, #tpu.memory_space<vmem>>, vector<16x128xf32>
    tpu.vector_store %arg4[%c0_6, %c0_7], %10 {strides = array<i32>} : memref<16x128xf32, #tpu.memory_space<vmem>>, vector<16x128xf32>,
    return
  }
  func.func @transform_0(%arg0: i32, %arg1: i32) -> (i32, i32) {
    %c1_i32 = arith.constant 1 : i32
    %0 = arith.muli %arg0, %c1_i32 : i32
    %1 = arith.addi %0, %arg1 : i32
    %c0_i32 = arith.constant 0 : i32
    %c0_i32_0 = arith.constant 0 : i32
    return %1, %c0_i32 : i32, i32
  }
  func.func @transform_1(%arg0: i32, %arg1: i32) -> (i32, i32) {
    %c1_i32 = arith.constant 1 : i32
    %0 = arith.muli %arg0, %c1_i32 : i32
    %1 = arith.addi %0, %arg1 : i32
    %c0_i32 = arith.constant 0 : i32
    %c0_i32_0 = arith.constant 0 : i32
    return %1, %c0_i32 : i32, i32
  }
  func.func @transform_2(%arg0: i32, %arg1: i32) -> (i32, i32) {
    %c0_i32 = arith.constant 0 : i32
    %c0_i32_0 = arith.constant 0 : i32
    return %arg0, %c0_i32 : i32, i32
  }
}

</mosaic_0001>

<llo_original>
// kernel: tpu_custom_call.1
$region0: #{tpu_custom_call.1}
  #allocation0 [shape = 'u32[]', space=smem, size = 0x4, offset = 0x4, fixed_abs, tag = 'smem constant byte address 0x4 - core index']
  #allocation1 [shape = 'u32[72,128]{1,0:T(1,128)}', space=vmem, size = 0x9000, scoped, tag = 'internal scratch']
  %s0 = inlined_call_operand.hbm [shape: f32[16,128], index: 0, kind: input, shape index: {}]
  %s1 = inlined_call_operand.hbm [shape: f32[16,128], index: 1, kind: input, shape index: {}]
  %s2 = inlined_call_operand.hbm [shape: f32[16,128], index: 2, kind: output, shape index: {}]
  %s3 = sld [smem:[#allocation0]]
  $region30: #{tpu_custom_call.1} parent=0
    _
  %s5 = ssub.s32 1, %s3
  %s6 = scalar_select 0, %s5, %s3
  $region1: #{tpu_custom_call.1} parent=0
    #allocation2 [shape = 'u8[8192]{0}', space=vmem, size = 0x2000, scoped, tag = 'input window, operand 0, single buffered']
    #allocation3 [shape = 's32[1]{0}', space=sflag, size = 0x4, scoped, tag = 'scoped memory for tpu_custom_call.1']
    #allocation4 [shape = 's32[1]{0}', space=sflag, size = 0x4, scoped, tag = 'scoped memory for tpu_custom_call.1']
    #allocation5 [shape = 'u8[8192]{0}', space=vmem, size = 0x2000, scoped, tag = 'input window, operand 1, single buffered']
    #allocation6 [shape = 's32[1]{0}', space=sflag, size = 0x4, scoped, tag = 'scoped memory for tpu_custom_call.1']
    #allocation7 [shape = 'u8[8192]{0}', space=vmem, size = 0x2000, scoped, tag = 'output window, operand 0, single buffered']
    %7 = vsyncpa [#allocation3], 0
    %8 = vsyncpa [#allocation6], 0
    %9 = vsyncpa [#allocation4], 0
    // Predicated region
    $region2: #{tpu_custom_call.1} parent=1 // pred_check
      _
    $region3: #{tpu_custom_call.1} parent=1 // pred_check_branch
      %11 = sbr.rel (0) target = $region5
    $region4: #{tpu_custom_call.1} parent=1 // pred_region
      %s12 = sadd.s32 0, 0
      %s13 = smul.u32 2, %s12
      %15 = vsyncadd [#allocation3], 0
      %s16 = smul.addr %s13, 8
      %s17 = scalar_lea.hbm %s0, %s16
      %s18 = sshll.u32 %s17, 4
      %s19 = int_to_ptr.hbm [resolvable:$true] %s18
      %s20 = sshll.u32 [#allocation2], 4
      %s21 = int_to_ptr.vmem [resolvable:$true] %s20
      %26 = dma.hbm_to_vmem [thread:$0]  %s19, 256, %s21, [#allocation3], 128, 128, 8
    $region5: #{tpu_custom_call.1} parent=1 // pred_fallthru
      _
    // Predicated region
    $region6: #{tpu_custom_call.1} parent=1 // pred_check
      _
    $region7: #{tpu_custom_call.1} parent=1 // pred_check_branch
      %28 = sbr.rel (0) target = $region9
    $region8: #{tpu_custom_call.1} parent=1 // pred_region
      %s29 = sadd.s32 0, 0
      %s30 = smul.u32 2, %s29
      %32 = vsyncadd [#allocation6], 0
      %s33 = smul.addr %s30, 8
      %s34 = scalar_lea.hbm %s1, %s33
      %s35 = sshll.u32 %s34, 4
      %s36 = int_to_ptr.hbm [resolvable:$true] %s35
      %s37 = sshll.u32 [#allocation5], 4
      %s38 = int_to_ptr.vmem [resolvable:$true] %s37
      %43 = dma.hbm_to_vmem [thread:$0]  %s36, 256, %s38, [#allocation6], 128, 128, 8
    $region9: #{tpu_custom_call.1} parent=1 // pred_fallthru
      _
    // Predicated region
    $region10: #{tpu_custom_call.1} parent=1 // pred_check
      _
    $region11: #{tpu_custom_call.1} parent=1 // pred_check_branch
      %45 = sbr.rel (0) target = $region13
    $region12: #{tpu_custom_call.1} parent=1 // pred_region
      %47 = dma.done [#allocation3], 256
    $region13: #{tpu_custom_call.1} parent=1 // pred_fallthru
      _
    // Predicated region
    $region14: #{tpu_custom_call.1} parent=1 // pred_check
      _
    $region15: #{tpu_custom_call.1} parent=1 // pred_check_branch
      %49 = sbr.rel (0) target = $region17
    $region16: #{tpu_custom_call.1} parent=1 // pred_region
      %51 = dma.done [#allocation6], 256
    $region17: #{tpu_custom_call.1} parent=1 // pred_fallthru
      _
    %s52 = sadd.s32 0, 0
    %s53 = smul.u32 2, %s52
    %s54 = sadd.s32 0, 0
    %s55 = smul.u32 2, %s54
    %p56 = scmp.eq.s32.totalorder 0, 0
    // Predicated region
    $region18: #{tpu_custom_call.1} parent=1 // pred_check
      %p57 = pneg %p56
    $region19: #{tpu_custom_call.1} parent=1 // pred_check_branch
      %59 = sbr.rel (%p57) target = $region21
    $region20: #{tpu_custom_call.1} parent=1 // pred_region
      %60 = vst [vmem:[#allocation7] sm:$0xff] 0.0
      %61 = vst [vmem:[#allocation7 + $0x8] sm:$0xff] 0.0
    $region21: #{tpu_custom_call.1} parent=1 // pred_fallthru
      _
    %v62 = vld [vmem:[#allocation2] sm:$0xff]
    %v63 = vld [vmem:[#allocation2 + $0x8] sm:$0xff]
    %v64 = vld [vmem:[#allocation5] sm:$0xff]
    %v65 = vld [vmem:[#allocation5 + $0x8] sm:$0xff]
    %v66 = vsub.f32 %v62, %v64
    %v67 = vsub.f32 %v63, %v65
    %v68 = vmul.f32 %v66, %v66
    %v69 = vmul.f32 %v67, %v67
    %v70 = vld [vmem:[#allocation7] sm:$0xff]
    %v71 = vld [vmem:[#allocation7 + $0x8] sm:$0xff]
    %v72 = vadd.f32 %v68, 0.0
    %v73 = vadd.f32 %v69, 0.0
    %v74 = vadd.f32 %v70, %v72
    %v75 = vadd.f32 %v71, %v73
    %76 = vst [vmem:[#allocation7] sm:$0xff] %v74
    %77 = vst [vmem:[#allocation7 + $0x8] sm:$0xff] %v75
    // Predicated region
    $region22: #{tpu_custom_call.1} parent=1 // pred_check
      _
    $region23: #{tpu_custom_call.1} parent=1 // pred_check_branch
      %79 = sbr.rel (0) target = $region25
    $region24: #{tpu_custom_call.1} parent=1 // pred_region
      %81 = vsyncadd [#allocation4], 0
      %s82 = sshll.u32 [#allocation7], 4
      %s83 = int_to_ptr.vmem [resolvable:$true] %s82
      %s84 = sshll.u32 %s2, 4
      %s85 = int_to_ptr.hbm [resolvable:$true] %s84
      %90 = dma.vmem_to_hbm [thread:$0]  %s83, 256, %s85, [#allocation4], 128, 128, 8
    $region25: #{tpu_custom_call.1} parent=1 // pred_fallthru
      _
    // Predicated region
    $region26: #{tpu_custom_call.1} parent=1 // pred_check
      _
    $region27: #{tpu_custom_call.1} parent=1 // pred_check_branch
      %92 = sbr.rel (0) target = $region29
    $region28: #{tpu_custom_call.1} parent=1 // pred_region
      %94 = dma.done [#allocation4], 256
    $region29: #{tpu_custom_call.1} parent=1 // pred_fallthru
      _
    %95 = vsyncpa [#allocation3], 1
    %96 = vsyncpa [#allocation6], 1
    %97 = vsyncpa [#allocation4], 1

</llo_original>
